<compile_context>
chip_gen: v7x
topology: tpu7x:2x2x1
jax: 0.10.0
libtpu: 0.0.40
codegen_flags: <defaults>
</compile_context>

<pallas_src>
import jax
import jax.numpy as jnp
from jax.experimental import pallas as pl
from jax.experimental.pallas import tpu as pltpu  # noqa: F401  (no TPU-specific params needed at this size)

# ---- problem sizes (small, consistent with the module) ----
B, N, D = 2, 16, 32          # batch, nodes, feature dim
E = 32                       # args.dep_relation_embed_dim
H = 64                       # hidden_size (module default)
DEP_REL_NUM = 40             # number of dependency relation types
NUM_LAYERS = 2               # module default
NEG_INF = -1e30


# ---------------- fused Pallas kernel ----------------
def rel_gat_fused_kernel(logits_ref, adj_ref, feat_ref, out_ref):
    """mask -> flattened softmax -> NUM_LAYERS x attention aggregation.

    logits_ref, adj_ref : (B, N, N) f32   per-edge logits (pre-gathered) / 0-1 mask
    feat_ref, out_ref   : (B, N, D)       node features in / out
    """
    # mask_logits: keep logit where an edge exists, else -1e30 (one vcmp+vselect;
    # adj is a 0/1 mask so this matches target*mask + (1-mask)*-1e30 exactly).
    masked = jnp.where(adj_ref[...] != 0.0, logits_ref[...], NEG_INF)

    # Softmax over the FLATTENED N*N dim per batch (== F.softmax(..., dim=1) on
    # (B, N*N)), expressed as two chained reduces to stay in matrix layout.
    m = jnp.max(jnp.max(masked, axis=2, keepdims=True), axis=1, keepdims=True)
    p = jnp.exp(masked - m)
    s = jnp.sum(jnp.sum(p, axis=2, keepdims=True), axis=1, keepdims=True)
    # EUP approximate reciprocal instead of a VALU divide.
    attn = p * pl.reciprocal(s, approx=True)                       # (B, N, N)

    # Attention is identical for every layer (same relation logits each layer);
    # dropout between layers is identity in eval mode.  Batched dot_general
    # packs both batches into the same grid step / MXU stream.
    f = feat_ref[...].astype(jnp.float32)
    for _ in range(NUM_LAYERS):
        f = jnp.einsum("bij,bjd->bid", attn, f,
                       preferred_element_type=jnp.float32)
    out_ref[...] = f.astype(out_ref.dtype)


# ---------------- wrapper ----------------
@jax.jit
def rel_gat_forward(adj, rel_adj, feature, embed_w, w1, b1, w2, b2):
    Bc, Nc, _ = adj.shape
    Dc = feature.shape[-1]

    # Per-relation logit table over only DEP_REL_NUM rows (tiny, fused by XLA):
    #   table[r] = relu(embed_w[r] @ W1 + b1) @ W2 + b2
    h = jnp.maximum(embed_w @ w1 + b1, 0.0)                   # (R, H)
    table = (h @ w2 + b2).reshape(-1).astype(jnp.float32)     # (R,)

    # Hoisted gather (trivial for XLA): per-edge logits, same HBM bytes as the
    # int32 ids it replaces.
    logits = jnp.take(table, rel_adj, axis=0).astype(jnp.float32)   # (B, N, N)
    adj_f = adj.astype(jnp.float32)

    # Single kernel invocation (grid=()): whole few-KB arrays live in VMEM as
    # one block each; no pipelining, no dimension_semantics needed.
    return pl.pallas_call(
        rel_gat_fused_kernel,
        out_shape=jax.ShapeDtypeStruct((Bc, Nc, Dc), feature.dtype),
        in_specs=[
            pl.BlockSpec((Bc, Nc, Nc), lambda: (0, 0, 0)),   # per-edge logits
            pl.BlockSpec((Bc, Nc, Nc), lambda: (0, 0, 0)),   # adjacency mask
            pl.BlockSpec((Bc, Nc, Dc), lambda: (0, 0, 0)),   # node features
        ],
        out_specs=pl.BlockSpec((Bc, Nc, Dc), lambda: (0, 0, 0)),
    )(logits, adj_f, feature)


# ---------------- pure-JAX reference (full per-edge MLP path) ----------------
def rel_gat_reference(adj, rel_adj, feature, embed_w, w1, b1, w2, b2):
    Bc, Nc, _ = adj.shape
    rel_v = jnp.take(embed_w, rel_adj.reshape(Bc, -1), axis=0)     # (B, N*N, E)
    h = jnp.maximum(rel_v @ w1 + b1, 0.0)
    logits = (h @ w2 + b2)[..., 0]                                 # (B, N*N)
    dmask = adj.reshape(Bc, -1)
    masked = logits * dmask + (1.0 - dmask) * NEG_INF
    attn = jax.nn.softmax(masked, axis=1).reshape(Bc, Nc, Nc)
    f = feature
    for _ in range(NUM_LAYERS):
        f = attn @ f
    return f


if __name__ == "__main__":
    key = jax.random.PRNGKey(0)
    k_adj, k_rel, k_feat, k_emb, k_w1, k_b1, k_w2, k_b2 = jax.random.split(key, 8)

    adj = (jax.random.uniform(k_adj, (B, N, N)) < 0.3).astype(jnp.float32)
    rel_adj = jax.random.randint(k_rel, (B, N, N), 0, DEP_REL_NUM, dtype=jnp.int32)
    feature = jax.random.normal(k_feat, (B, N, D), dtype=jnp.float32)

    # deterministic synthetic parameters (shapes per module __init__)
    lim = (6.0 / (DEP_REL_NUM + E)) ** 0.5                         # xavier_uniform
    embed_w = jax.random.uniform(k_emb, (DEP_REL_NUM, E),
                                 minval=-lim, maxval=lim, dtype=jnp.float32)
    w1 = jax.random.normal(k_w1, (E, H), dtype=jnp.float32) * 0.1  # Linear(E -> H)
    b1 = jax.random.normal(k_b1, (1, H), dtype=jnp.float32) * 0.01
    w2 = jax.random.normal(k_w2, (H, 1), dtype=jnp.float32) * 0.1  # Linear(H -> 1)
    b2 = jax.random.normal(k_b2, (1, 1), dtype=jnp.float32) * 0.01

    out = rel_gat_forward(adj, rel_adj, feature, embed_w, w1, b1, w2, b2)
    out = jax.block_until_ready(out)

    ref = rel_gat_reference(adj, rel_adj, feature, embed_w, w1, b1, w2, b2)
    assert out.shape == (B, N, D)
    # approx-reciprocal softmax denominator -> slightly looser tolerance (review-flagged)
    assert jnp.allclose(out, ref, atol=2e-3, rtol=2e-3), "Pallas output mismatch vs reference"
    print("KERNEL_OK")
</pallas_src>

<mosaic_0001>
module attributes {stable_mosaic.version = 11 : i64} {
  func.func @rel_gat_fused_kernel(%arg0: memref<2x16x16xf32, #tpu.memory_space<vmem>>, %arg1: memref<2x16x16xf32, #tpu.memory_space<vmem>>, %arg2: memref<2x16x32xf32, #tpu.memory_space<vmem>>, %arg3: memref<2x16x32xf32, #tpu.memory_space<vmem>>) attributes {dimension_semantics = [], scalar_prefetch = 0 : i64, scratch_operands = 0 : i64, tpu.core_type = #tpu.core_type<tc>} {
    %c0 = arith.constant 0 : index
    %c0_0 = arith.constant 0 : index
    %c0_1 = arith.constant 0 : index
    %0 = vector.load %arg1[%c0, %c0_0, %c0_1] : memref<2x16x16xf32, #tpu.memory_space<vmem>>, vector<2x16x16xf32>
    %cst = arith.constant 0.000000e+00 : f32
    %1 = vector.broadcast %cst : f32 to vector<2x16x16xf32>
    %2 = arith.cmpf one, %0, %1 : vector<2x16x16xf32>
    %c0_2 = arith.constant 0 : index
    %c0_3 = arith.constant 0 : index
    %c0_4 = arith.constant 0 : index
    %3 = vector.load %arg0[%c0_2, %c0_3, %c0_4] : memref<2x16x16xf32, #tpu.memory_space<vmem>>, vector<2x16x16xf32>
    %cst_5 = arith.constant -1.000000e+30 : f32
    %4 = vector.broadcast %cst_5 : f32 to vector<2x16x16xf32>
    %5 = arith.select %2, %3, %4 : vector<2x16x16xi1>, vector<2x16x16xf32>
    %cst_6 = arith.constant dense<0xFF800000> : vector<2x16xf32>
    %6 = vector.multi_reduction <maximumf>, %5, %cst_6 [2] : vector<2x16x16xf32> to vector<2x16xf32>
    %7 = vector.shape_cast %6 : vector<2x16xf32> to vector<2x16x1xf32>
    %cst_7 = arith.constant dense<0xFF800000> : vector<2x1xf32>
    %8 = vector.multi_reduction <maximumf>, %7, %cst_7 [1] : vector<2x16x1xf32> to vector<2x1xf32>
    %9 = vector.shape_cast %8 : vector<2x1xf32> to vector<2x1x1xf32>
    %10 = vector.broadcast %9 : vector<2x1x1xf32> to vector<2x16x16xf32>
    %11 = arith.subf %5, %10 : vector<2x16x16xf32>
    %12 = math.exp %11 : vector<2x16x16xf32>
    %cst_8 = arith.constant dense<0.000000e+00> : vector<2x16xf32>
    %13 = vector.multi_reduction <add>, %12, %cst_8 [2] : vector<2x16x16xf32> to vector<2x16xf32>
    %14 = vector.shape_cast %13 : vector<2x16xf32> to vector<2x16x1xf32>
    %cst_9 = arith.constant dense<0.000000e+00> : vector<2x1xf32>
    %15 = vector.multi_reduction <add>, %14, %cst_9 [1] : vector<2x16x1xf32> to vector<2x1xf32>
    %16 = vector.shape_cast %15 : vector<2x1xf32> to vector<2x1x1xf32>
    %17 = tpu.reciprocal %16 {approx = true} : vector<2x1x1xf32> -> vector<2x1x1xf32>
    %18 = vector.broadcast %17 : vector<2x1x1xf32> to vector<2x16x16xf32>
    %19 = arith.mulf %12, %18 : vector<2x16x16xf32>
    %c0_10 = arith.constant 0 : index
    %c0_11 = arith.constant 0 : index
    %c0_12 = arith.constant 0 : index
    %20 = vector.load %arg2[%c0_10, %c0_11, %c0_12] : memref<2x16x32xf32, #tpu.memory_space<vmem>>, vector<2x16x32xf32>
    "tpu.trace_start"() <{level = 10 : i32, message = "bij,bjd->bid"}> : () -> ()
    %cst_13 = arith.constant dense<0.000000e+00> : vector<2x16x32xf32>
    %21 = tpu.matmul %19, %20, %cst_13 {dimension_numbers = #tpu.dot_dimension_numbers<[2], [1], [1], [2], [0, 0, 0, 1, 1, 2], [0], [0]>} : vector<2x16x16xf32>, vector<2x16x32xf32>, vector<2x16x32xf32> -> vector<2x16x32xf32>
    %cst_14 = arith.constant dense<0.000000e+00> : vector<2x16x32xf32>
    %22 = tpu.matmul %19, %21, %cst_14 {dimension_numbers = #tpu.dot_dimension_numbers<[2], [1], [1], [2], [0, 0, 0, 1, 1, 2], [0], [0]>} : vector<2x16x16xf32>, vector<2x16x32xf32>, vector<2x16x32xf32> -> vector<2x16x32xf32>
    "tpu.trace_stop"() : () -> ()
    %c0_15 = arith.constant 0 : index
    %c0_16 = arith.constant 0 : index
    %c0_17 = arith.constant 0 : index
    %23 = vector.load %arg3[%c0_15, %c0_16, %c0_17] : memref<2x16x32xf32, #tpu.memory_space<vmem>>, vector<2x16x32xf32>
    tpu.vector_store %arg3[%c0_15, %c0_16, %c0_17], %22 {strides = array<i32>} : memref<2x16x32xf32, #tpu.memory_space<vmem>>, vector<2x16x32xf32>,
    return
  }
}

</mosaic_0001>

<llo_original>
// kernel: rel_gat_forward.1
$region0: #{rel_gat_forward.1}
  #allocation0 [shape = 'u32[]', space=smem, size = 0x4, offset = 0x4, fixed_abs, tag = 'smem constant byte address 0x4 - core index']
  #allocation1 [shape = 'u32[144,128]{1,0:T(1,128)}', space=vmem, size = 0x12000, scoped, tag = 'internal scratch']
  %s0 = inlined_call_operand.vmem [shape: f32[2,16,16], index: 0, kind: input, shape index: {}]
  %s1 = inlined_call_operand.vmem [shape: f32[2,16,16], index: 1, kind: input, shape index: {}]
  %s2 = inlined_call_operand.vmem [shape: f32[2,16,32], index: 2, kind: input, shape index: {}]
  %s3 = inlined_call_operand.hbm [shape: f32[2,16,32], index: 3, kind: output, shape index: {}]
  %s4 = sld [smem:[#allocation0]]
  $region22: #{rel_gat_forward.1} parent=0
    _
  %s6 = ssub.s32 1, %s4
  %s7 = scalar_select 0, %s6, %s4
  $region1: #{rel_gat_forward.1} parent=0
    #allocation2 [shape = 'u8[16384]{0}', space=vmem, size = 0x4000, scoped, tag = 'output window, operand 0, single buffered']
    #allocation3 [shape = 's32[1]{0}', space=sflag, size = 0x4, scoped, tag = 'scoped memory for rel_gat_forward.1']
    %8 = vsyncpa [#allocation3], 0
    // Predicated region
    $region2: #{rel_gat_forward.1} parent=1 // pred_check
      _
    $region3: #{rel_gat_forward.1} parent=1 // pred_check_branch
      %10 = sbr.rel (0) target = $region5
    $region4: #{rel_gat_forward.1} parent=1 // pred_region
      _
    $region5: #{rel_gat_forward.1} parent=1 // pred_fallthru
      _
    // Predicated region
    $region6: #{rel_gat_forward.1} parent=1 // pred_check
      _
    $region7: #{rel_gat_forward.1} parent=1 // pred_check_branch
      %12 = sbr.rel (0) target = $region9
    $region8: #{rel_gat_forward.1} parent=1 // pred_region
      _
    $region9: #{rel_gat_forward.1} parent=1 // pred_fallthru
      _
    // Predicated region
    $region10: #{rel_gat_forward.1} parent=1 // pred_check
      _
    $region11: #{rel_gat_forward.1} parent=1 // pred_check_branch
      %14 = sbr.rel (0) target = $region13
    $region12: #{rel_gat_forward.1} parent=1 // pred_region
      _
    $region13: #{rel_gat_forward.1} parent=1 // pred_fallthru
      _
    %v15 = vld [vmem:[%s1] sm:$0xff]
    %v16 = vld [vmem:[%s1 + $0x8] sm:$0xff]
    %v17 = vld [vmem:[%s1 + $0x10] sm:$0xff]
    %v18 = vld [vmem:[%s1 + $0x18] sm:$0xff]
    %vm19 = vcmp.ne.f32.partialorder %v15, 0.0
    %vm20 = vcmp.ne.f32.partialorder %v16, 0.0
    %vm21 = vcmp.ne.f32.partialorder %v17, 0.0
    %vm22 = vcmp.ne.f32.partialorder %v18, 0.0
    %v23 = vld [vmem:[%s0] sm:$0xff]
    %v24 = vld [vmem:[%s0 + $0x8] sm:$0xff]
    %v25 = vld [vmem:[%s0 + $0x10] sm:$0xff]
    %v26 = vld [vmem:[%s0 + $0x18] sm:$0xff]
    %v27 = vsel %vm19, %v23, -1e+30
    %v28 = vsel %vm20, %v24, -1e+30
    %v29 = vsel %vm21, %v25, -1e+30
    %v30 = vsel %vm22, %v26, -1e+30
    %vm31 = vcmask 130048
    %v32 = vsel %vm31, %v27, -inf
    %33 = vmax.xlane.f32.xlu0 %v32
    %v34 = vpop.xlane.xlu0 %33
    %v35 = vsel %vm31, %v28, -inf
    %36 = vmax.xlane.f32.xlu0 %v35
    %v37 = vpop.xlane.xlu0 %36
    %v38 = vsel %vm31, %v29, -inf
    %39 = vmax.xlane.f32.xlu0 %v38
    %v40 = vpop.xlane.xlu0 %39
    %v41 = vsel %vm31, %v30, -inf
    %42 = vmax.xlane.f32.xlu0 %v41
    %v43 = vpop.xlane.xlu0 %42
    %v44 = vmax.f32 %v34, %v37
    %v45 = vrot.slane %v44, 4
    %v46 = vmax.f32 %v44, %v45
    %v47 = vrot.slane %v46, 2
    %v48 = vmax.f32 %v46, %v47
    %v49 = vrot.slane %v48, 1
    %v50 = vmax.f32 %v48, %v49
    %v51 = vmax.f32 %v40, %v43
    %v52 = vrot.slane %v51, 4
    %v53 = vmax.f32 %v51, %v52
    %v54 = vrot.slane %v53, 2
    %v55 = vmax.f32 %v53, %v54
    %v56 = vrot.slane %v55, 1
    %v57 = vmax.f32 %v55, %v56
    %v58 = vsub.f32 %v27, %v50
    %v59 = vsub.f32 %v28, %v50
    %v60 = vsub.f32 %v29, %v57
    %v61 = vsub.f32 %v30, %v57
    %v62 = vmul.f32 %v58, 1.442695
    %v63 = vpow.pop %v62
    %v64 = vmul.f32 %v59, 1.442695
    %v65 = vpow.pop %v64
    %v66 = vmul.f32 %v60, 1.442695
    %v67 = vpow.pop %v66
    %v68 = vmul.f32 %v61, 1.442695
    %v69 = vpow.pop %v68
    %v70 = vsel %vm31, %v63, 0.0
    %71 = vadd.xlane.f32.xlu0 %v70
    %v72 = vpop.xlane.xlu0 %71
    %v73 = vsel %vm31, %v65, 0.0
    %74 = vadd.xlane.f32.xlu0 %v73
    %v75 = vpop.xlane.xlu0 %74
    %v76 = vsel %vm31, %v67, 0.0
    %77 = vadd.xlane.f32.xlu0 %v76
    %v78 = vpop.xlane.xlu0 %77
    %v79 = vsel %vm31, %v69, 0.0
    %80 = vadd.xlane.f32.xlu0 %v79
    %v81 = vpop.xlane.xlu0 %80
    %v82 = vadd.f32 %v72, %v75
    %v83 = vrot.slane %v82, 4
    %v84 = vadd.f32 %v82, %v83
    %v85 = vrot.slane %v84, 2
    %v86 = vadd.f32 %v84, %v85
    %v87 = vrot.slane %v86, 1
    %v88 = vadd.f32 %v86, %v87
    %v89 = vadd.f32 %v78, %v81
    %v90 = vrot.slane %v89, 4
    %v91 = vadd.f32 %v89, %v90
    %v92 = vrot.slane %v91, 2
    %v93 = vadd.f32 %v91, %v92
    %v94 = vrot.slane %v93, 1
    %v95 = vadd.f32 %v93, %v94
    %v96 = vrcp.pop %v88
    %v97 = vrcp.pop %v95
    %v98 = vmul.f32 %v63, %v96
    %v99 = vmul.f32 %v65, %v96
    %v100 = vmul.f32 %v67, %v97
    %v101 = vmul.f32 %v69, %v97
    %v102 = vld [vmem:[%s2] sm:$0xff]
    %v103 = vld [vmem:[%s2 + $0x8] sm:$0xff]
    %v104 = vld [vmem:[%s2 + $0x10] sm:$0xff]
    %v105 = vld [vmem:[%s2 + $0x18] sm:$0xff]
    %v107 = vsel %vm31, %v98, 0
    %v110 = vsel %vm31, %v99, 0
    %112 = vmatprep.subr.mxu0 0.0
    %113 = vmatpush1.msra.mxu0 %v102
    %114 = vmatprep.subr.mxu0 0.0
    %115 = vmatpush1.msra.mxu0 %v103
    %116 = vmatprep.subr.mxu0 0.0
    %117 = vmatpush1.msra.mxu0 0.0
    %118 = vmatprep.subr.mxu0 0.0
    %119 = vmatpush1.msra.mxu0 0.0
    %120 = vmatprep.subr.mxu0 0.0
    %121 = vmatpush1.msra.mxu0 0.0
    %122 = vmatprep.subr.mxu0 0.0
    %123 = vmatpush1.msra.mxu0 0.0
    %124 = vmatprep.subr.mxu0 0.0
    %125 = vmatpush1.msra.mxu0 0.0
    %126 = vmatprep.subr.mxu0 0.0
    %127 = vmatpush1.msra.mxu0 0.0
    %128 = vmatprep.subr.mxu0 0.0
    %129 = vmatpush1.msra.mxu0 0.0
    %130 = vmatprep.subr.mxu0 0.0
    %131 = vmatpush1.msra.mxu0 0.0
    %132 = vmatprep.subr.mxu0 0.0
    %133 = vmatpush1.msra.mxu0 0.0
    %134 = vmatprep.subr.mxu0 0.0
    %135 = vmatpush1.msra.mxu0 0.0
    %136 = vmatprep.subr.mxu0 0.0
    %137 = vmatpush1.msra.mxu0 0.0
    %138 = vmatprep.subr.mxu0 0.0
    %139 = vmatpush1.msra.mxu0 0.0
    %140 = vmatprep.subr.mxu0 0.0
    %141 = vmatpush1.msra.mxu0 0.0
    %142 = vmatprep.subr.mxu0 0.0
    %143 = vmatpush1.msra.mxu0 0.0
    %144 = vmatprep.subr.mxu0 0.0
    %145 = vmatpush1.msra.mxu0 0.0
    %146 = vmatprep.subr.mxu0 0.0
    %147 = vmatpush1.msra.mxu0 0.0
    %148 = vmatprep.subr.mxu0 0.0
    %149 = vmatpush1.msra.mxu0 0.0
    %150 = vmatprep.subr.mxu0 0.0
    %151 = vmatpush1.msra.mxu0 0.0
    %152 = vmatprep.subr.mxu0 0.0
    %153 = vmatpush1.msra.mxu0 0.0
    %154 = vmatprep.subr.mxu0 0.0
    %155 = vmatpush1.msra.mxu0 0.0
    %156 = vmatprep.subr.mxu0 0.0
    %157 = vmatpush1.msra.mxu0 0.0
    %158 = vmatprep.subr.mxu0 0.0
    %159 = vmatpush1.msra.mxu0 0.0
    %160 = vmatprep.subr.mxu0 0.0
    %161 = vmatpush1.msra.mxu0 0.0
    %162 = vmatprep.subr.mxu0 0.0
    %163 = vmatpush1.msra.mxu0 0.0
    %164 = vmatprep.subr.mxu0 0.0
    %165 = vmatpush1.msra.mxu0 0.0
    %166 = vmatprep.subr.mxu0 0.0
    %167 = vmatpush1.msra.mxu0 0.0
    %168 = vmatprep.subr.mxu0 0.0
    %169 = vmatpush1.msra.mxu0 0.0
    %170 = vmatprep.subr.mxu0 0.0
    %171 = vmatpush1.msra.mxu0 0.0
    %172 = vmatprep.subr.mxu0 0.0
    %173 = vmatpush1.msra.mxu0 0.0
    %174 = vmatprep.subr.mxu0 0.0
    %175 = vmatpush1.msra.mxu0 0.0
    %176 = vmatprep.mubr.f32.mxu0 0.0
    %177 = vmatmul.mubr.f32.gmra.mrb[0].mxu0 %v107
    %v178 = vpop.f32.mrb[0].mxu0
    %v179 = vadd.f32 0.0, %v178
    %v180 = vpop.f32.mrb[0].mxu0
    %181 = vmatprep.mubr.f32.mxu0 0.0
    %182 = vmatmul.mubr.f32.gmra.mrb[0].mxu0 %v110
    %v183 = vpop.f32.mrb[0].mxu0
    %v184 = vadd.f32 0.0, %v183
    %v185 = vpop.f32.mrb[0].mxu0
    %186 = vdwg.mxu0
    %v188 = vsel %vm31, %v100, 0
    %v191 = vsel %vm31, %v101, 0
    %193 = vmatprep.subr.mxu0 0.0
    %194 = vmatpush1.msra.mxu0 %v104
    %195 = vmatprep.subr.mxu0 0.0
    %196 = vmatpush1.msra.mxu0 %v105
    %197 = vmatprep.subr.mxu0 0.0
    %198 = vmatpush1.msra.mxu0 0.0
    %199 = vmatprep.subr.mxu0 0.0
    %200 = vmatpush1.msra.mxu0 0.0
    %201 = vmatprep.subr.mxu0 0.0
    %202 = vmatpush1.msra.mxu0 0.0
    %203 = vmatprep.subr.mxu0 0.0
    %204 = vmatpush1.msra.mxu0 0.0
    %205 = vmatprep.subr.mxu0 0.0
    %206 = vmatpush1.msra.mxu0 0.0
    %207 = vmatprep.subr.mxu0 0.0
    %208 = vmatpush1.msra.mxu0 0.0
    %209 = vmatprep.subr.mxu0 0.0
    %210 = vmatpush1.msra.mxu0 0.0
    %211 = vmatprep.subr.mxu0 0.0
    %212 = vmatpush1.msra.mxu0 0.0
    %213 = vmatprep.subr.mxu0 0.0
    %214 = vmatpush1.msra.mxu0 0.0
    %215 = vmatprep.subr.mxu0 0.0
    %216 = vmatpush1.msra.mxu0 0.0
    %217 = vmatprep.subr.mxu0 0.0
    %218 = vmatpush1.msra.mxu0 0.0
    %219 = vmatprep.subr.mxu0 0.0
    %220 = vmatpush1.msra.mxu0 0.0
    %221 = vmatprep.subr.mxu0 0.0
    %222 = vmatpush1.msra.mxu0 0.0
    %223 = vmatprep.subr.mxu0 0.0
    %224 = vmatpush1.msra.mxu0 0.0
    %225 = vmatprep.subr.mxu0 0.0
    %226 = vmatpush1.msra.mxu0 0.0
    %227 = vmatprep.subr.mxu0 0.0
    %228 = vmatpush1.msra.mxu0 0.0
    %229 = vmatprep.subr.mxu0 0.0
    %230 = vmatpush1.msra.mxu0 0.0
    %231 = vmatprep.subr.mxu0 0.0
    %232 = vmatpush1.msra.mxu0 0.0
    %233 = vmatprep.subr.mxu0 0.0
    %234 = vmatpush1.msra.mxu0 0.0
    %235 = vmatprep.subr.mxu0 0.0
    %236 = vmatpush1.msra.mxu0 0.0
    %237 = vmatprep.subr.mxu0 0.0
    %238 = vmatpush1.msra.mxu0 0.0
    %239 = vmatprep.subr.mxu0 0.0
    %240 = vmatpush1.msra.mxu0 0.0
    %241 = vmatprep.subr.mxu0 0.0
    %242 = vmatpush1.msra.mxu0 0.0
    %243 = vmatprep.subr.mxu0 0.0
    %244 = vmatpush1.msra.mxu0 0.0
    %245 = vmatprep.subr.mxu0 0.0
    %246 = vmatpush1.msra.mxu0 0.0
    %247 = vmatprep.subr.mxu0 0.0
    %248 = vmatpush1.msra.mxu0 0.0
    %249 = vmatprep.subr.mxu0 0.0
    %250 = vmatpush1.msra.mxu0 0.0
    %251 = vmatprep.subr.mxu0 0.0
    %252 = vmatpush1.msra.mxu0 0.0
    %253 = vmatprep.subr.mxu0 0.0
    %254 = vmatpush1.msra.mxu0 0.0
    %255 = vmatprep.subr.mxu0 0.0
    %256 = vmatpush1.msra.mxu0 0.0
    %257 = vmatprep.mubr.f32.mxu0 0.0
    %258 = vmatmul.mubr.f32.gmra.mrb[0].mxu0 %v188
    %v259 = vpop.f32.mrb[0].mxu0
    %v260 = vadd.f32 0.0, %v259
    %v261 = vpop.f32.mrb[0].mxu0
    %262 = vmatprep.mubr.f32.mxu0 0.0
    %263 = vmatmul.mubr.f32.gmra.mrb[0].mxu0 %v191
    %v264 = vpop.f32.mrb[0].mxu0
    %v265 = vadd.f32 0.0, %v264
    %v266 = vpop.f32.mrb[0].mxu0
    %267 = vdwg.mxu0
    %268 = vmatprep.subr.mxu0 0.0
    %269 = vmatpush1.msra.mxu0 %v179
    %270 = vmatprep.subr.mxu0 0.0
    %271 = vmatpush1.msra.mxu0 %v184
    %272 = vmatprep.subr.mxu0 0.0
    %273 = vmatpush1.msra.mxu0 0.0
    %274 = vmatprep.subr.mxu0 0.0
    %275 = vmatpush1.msra.mxu0 0.0
    %276 = vmatprep.subr.mxu0 0.0
    %277 = vmatpush1.msra.mxu0 0.0
    %278 = vmatprep.subr.mxu0 0.0
    %279 = vmatpush1.msra.mxu0 0.0
    %280 = vmatprep.subr.mxu0 0.0
    %281 = vmatpush1.msra.mxu0 0.0
    %282 = vmatprep.subr.mxu0 0.0
    %283 = vmatpush1.msra.mxu0 0.0
    %284 = vmatprep.subr.mxu0 0.0
    %285 = vmatpush1.msra.mxu0 0.0
    %286 = vmatprep.subr.mxu0 0.0
    %287 = vmatpush1.msra.mxu0 0.0
    %288 = vmatprep.subr.mxu0 0.0
    %289 = vmatpush1.msra.mxu0 0.0
    %290 = vmatprep.subr.mxu0 0.0
    %291 = vmatpush1.msra.mxu0 0.0
    %292 = vmatprep.subr.mxu0 0.0
    %293 = vmatpush1.msra.mxu0 0.0
    %294 = vmatprep.subr.mxu0 0.0
    %295 = vmatpush1.msra.mxu0 0.0
    %296 = vmatprep.subr.mxu0 0.0
    %297 = vmatpush1.msra.mxu0 0.0
    %298 = vmatprep.subr.mxu0 0.0
    %299 = vmatpush1.msra.mxu0 0.0
    %300 = vmatprep.subr.mxu0 0.0
    %301 = vmatpush1.msra.mxu0 0.0
    %302 = vmatprep.subr.mxu0 0.0
    %303 = vmatpush1.msra.mxu0 0.0
    %304 = vmatprep.subr.mxu0 0.0
    %305 = vmatpush1.msra.mxu0 0.0
    %306 = vmatprep.subr.mxu0 0.0
    %307 = vmatpush1.msra.mxu0 0.0
    %308 = vmatprep.subr.mxu0 0.0
    %309 = vmatpush1.msra.mxu0 0.0
    %310 = vmatprep.subr.mxu0 0.0
    %311 = vmatpush1.msra.mxu0 0.0
    %312 = vmatprep.subr.mxu0 0.0
    %313 = vmatpush1.msra.mxu0 0.0
    %314 = vmatprep.subr.mxu0 0.0
    %315 = vmatpush1.msra.mxu0 0.0
    %316 = vmatprep.subr.mxu0 0.0
    %317 = vmatpush1.msra.mxu0 0.0
    %318 = vmatprep.subr.mxu0 0.0
    %319 = vmatpush1.msra.mxu0 0.0
    %320 = vmatprep.subr.mxu0 0.0
    %321 = vmatpush1.msra.mxu0 0.0
    %322 = vmatprep.subr.mxu0 0.0
    %323 = vmatpush1.msra.mxu0 0.0
    %324 = vmatprep.subr.mxu0 0.0
    %325 = vmatpush1.msra.mxu0 0.0
    %326 = vmatprep.subr.mxu0 0.0
    %327 = vmatpush1.msra.mxu0 0.0
    %328 = vmatprep.subr.mxu0 0.0
    %329 = vmatpush1.msra.mxu0 0.0
    %330 = vmatprep.subr.mxu0 0.0
    %331 = vmatpush1.msra.mxu0 0.0
    %332 = vmatprep.mubr.f32.mxu0 0.0
    %333 = vmatmul.mubr.f32.gmra.mrb[0].mxu0 %v107
    %v334 = vpop.f32.mrb[0].mxu0
    %v335 = vadd.f32 0.0, %v334
    %v336 = vpop.f32.mrb[0].mxu0
    %337 = vmatprep.mubr.f32.mxu0 0.0
    %338 = vmatmul.mubr.f32.gmra.mrb[0].mxu0 %v110
    %v339 = vpop.f32.mrb[0].mxu0
    %v340 = vadd.f32 0.0, %v339
    %v341 = vpop.f32.mrb[0].mxu0
    %342 = vdwg.mxu0
    %343 = vmatprep.subr.mxu0 0.0
    %344 = vmatpush1.msra.mxu0 %v260
    %345 = vmatprep.subr.mxu0 0.0
    %346 = vmatpush1.msra.mxu0 %v265
    %347 = vmatprep.subr.mxu0 0.0
    %348 = vmatpush1.msra.mxu0 0.0
    %349 = vmatprep.subr.mxu0 0.0
    %350 = vmatpush1.msra.mxu0 0.0
    %351 = vmatprep.subr.mxu0 0.0
    %352 = vmatpush1.msra.mxu0 0.0
    %353 = vmatprep.subr.mxu0 0.0
    %354 = vmatpush1.msra.mxu0 0.0
    %355 = vmatprep.subr.mxu0 0.0
    %356 = vmatpush1.msra.mxu0 0.0
    %357 = vmatprep.subr.mxu0 0.0
    %358 = vmatpush1.msra.mxu0 0.0
    %359 = vmatprep.subr.mxu0 0.0
    %360 = vmatpush1.msra.mxu0 0.0
    %361 = vmatprep.subr.mxu0 0.0
    %362 = vmatpush1.msra.mxu0 0.0
    %363 = vmatprep.subr.mxu0 0.0
    %364 = vmatpush1.msra.mxu0 0.0
    %365 = vmatprep.subr.mxu0 0.0
    %366 = vmatpush1.msra.mxu0 0.0
    %367 = vmatprep.subr.mxu0 0.0
    %368 = vmatpush1.msra.mxu0 0.0
    %369 = vmatprep.subr.mxu0 0.0
    %370 = vmatpush1.msra.mxu0 0.0
    %371 = vmatprep.subr.mxu0 0.0
    %372 = vmatpush1.msra.mxu0 0.0
    %373 = vmatprep.subr.mxu0 0.0
    %374 = vmatpush1.msra.mxu0 0.0
    %375 = vmatprep.subr.mxu0 0.0
    %376 = vmatpush1.msra.mxu0 0.0
    %377 = vmatprep.subr.mxu0 0.0
    %378 = vmatpush1.msra.mxu0 0.0
    %379 = vmatprep.subr.mxu0 0.0
    %380 = vmatpush1.msra.mxu0 0.0
    %381 = vmatprep.subr.mxu0 0.0
    %382 = vmatpush1.msra.mxu0 0.0
    %383 = vmatprep.subr.mxu0 0.0
    %384 = vmatpush1.msra.mxu0 0.0
    %385 = vmatprep.subr.mxu0 0.0
    %386 = vmatpush1.msra.mxu0 0.0
    %387 = vmatprep.subr.mxu0 0.0
    %388 = vmatpush1.msra.mxu0 0.0
    %389 = vmatprep.subr.mxu0 0.0
    %390 = vmatpush1.msra.mxu0 0.0
    %391 = vmatprep.subr.mxu0 0.0
    %392 = vmatpush1.msra.mxu0 0.0
    %393 = vmatprep.subr.mxu0 0.0
    %394 = vmatpush1.msra.mxu0 0.0
    %395 = vmatprep.subr.mxu0 0.0
    %396 = vmatpush1.msra.mxu0 0.0
    %397 = vmatprep.subr.mxu0 0.0
    %398 = vmatpush1.msra.mxu0 0.0
    %399 = vmatprep.subr.mxu0 0.0
    %400 = vmatpush1.msra.mxu0 0.0
    %401 = vmatprep.subr.mxu0 0.0
    %402 = vmatpush1.msra.mxu0 0.0
    %403 = vmatprep.subr.mxu0 0.0
    %404 = vmatpush1.msra.mxu0 0.0
    %405 = vmatprep.subr.mxu0 0.0
    %406 = vmatpush1.msra.mxu0 0.0
    %407 = vmatprep.mubr.f32.mxu0 0.0
    %408 = vmatmul.mubr.f32.gmra.mrb[0].mxu0 %v188
    %v409 = vpop.f32.mrb[0].mxu0
    %v410 = vadd.f32 0.0, %v409
    %v411 = vpop.f32.mrb[0].mxu0
    %412 = vmatprep.mubr.f32.mxu0 0.0
    %413 = vmatmul.mubr.f32.gmra.mrb[0].mxu0 %v191
    %v414 = vpop.f32.mrb[0].mxu0
    %v415 = vadd.f32 0.0, %v414
    %v416 = vpop.f32.mrb[0].mxu0
    %417 = vdwg.mxu0
    %vm418 = vcmask 261120
    %419 = vst.msk [vmem:[#allocation2] sm:$0xff] %vm418, %v335
    %420 = vst.msk [vmem:[#allocation2 + $0x8] sm:$0xff] %vm418, %v340
    %421 = vst.msk [vmem:[#allocation2 + $0x10] sm:$0xff] %vm418, %v410
    %422 = vst.msk [vmem:[#allocation2 + $0x18] sm:$0xff] %vm418, %v415
    // Predicated region
    $region14: #{rel_gat_forward.1} parent=1 // pred_check
      _
    $region15: #{rel_gat_forward.1} parent=1 // pred_check_branch
      %424 = sbr.rel (0) target = $region17
    $region16: #{rel_gat_forward.1} parent=1 // pred_region
      %s426 = ssub.s32 512, 512
      %427 = vsyncadd [#allocation3], %s426
      %s428 = sshll.u32 [#allocation2], 4
      %s429 = int_to_ptr.vmem [resolvable:$true] %s428
      %434 = dma.vmem_to_hbm [thread:$0]  %s429, 512, %s3, [#allocation3], 128, 128, 8
    $region17: #{rel_gat_forward.1} parent=1 // pred_fallthru
      _
    // Predicated region
    $region18: #{rel_gat_forward.1} parent=1 // pred_check
      _
    $region19: #{rel_gat_forward.1} parent=1 // pred_check_branch
      %436 = sbr.rel (0) target = $region21
    $region20: #{rel_gat_forward.1} parent=1 // pred_region
      %437 = dma.done [#allocation3], 512
    $region21: #{rel_gat_forward.1} parent=1 // pred_fallthru
      _
    %438 = vsyncpa [#allocation3], 1

</llo_original>
